<compile_context>
chip_gen: v6e
topology: v6e:2x2x1
jax: 0.10.0
libtpu: 0.0.40
codegen_flags: <defaults>
</compile_context>

<pallas_src>
import jax
import jax.numpy as jnp
from jax.experimental import pallas as pl
from jax.experimental.pallas import tpu as pltpu

INPUT_DIM = 14          # input channels (free choice; seq_len is fixed by Linear(98, .))
SEQ_LEN = 30            # forced by Linear(98, 64): 14 * 7 = 98 features

C1, K1 = 8, 4           # conv1 out-channels / kernel
C2, K2 = 14, 3          # conv2 out-channels / kernel

L1 = SEQ_LEN + 2 - K1 + 1      # 29
P1_LEN = L1 // 2               # 14
L2 = P1_LEN + 2 - K2 + 1       # 14
P2_LEN = L2 // 2               # 7
FEAT = C2 * P2_LEN             # 98
HINT_DIM = 64

LP1 = SEQ_LEN + 2              # 32  conv1 zero-padded input length
LP2 = P1_LEN + 2               # 16  conv2 zero-padded input length
N1 = C1 * L1                   # 232 conv1 output columns (channel-major)
N2 = C2 * L2                   # 196 conv2 output columns
KC2 = C1 * LP2                 # 128 conv2 GEMM contraction dim


def _round_up(x, m):
    return (x + m - 1) // m * m


N1_PAD = _round_up(N1, 128)          # 256
N2_PAD = _round_up(N2, 128)          # 256
FEAT_PAD = _round_up(FEAT, 128)      # 128
HINT_PAD = _round_up(HINT_DIM, 128)  # 128


def _generator_kernel(x_ref, m1_ref, b1_ref, p1_ref, m2_ref, b2_ref, p2_ref,
                      wa_ref, ba_ref, fea_ref, hint_ref):
    # x_ref: (Bt, kc1_pad) -- a batch tile, each row = zero-padded (C, 32) flattened.
    x = x_ref[...]
    # Conv1d(C, 8, k=4, p=1) + bias + sigmoid   (pad columns give sigmoid(0)=0.5,
    # killed by the zero rows of the pooling matrix).
    h1 = jax.nn.sigmoid(
        jnp.dot(x, m1_ref[...], preferred_element_type=jnp.float32) + b1_ref[...])
    # AvgPool1d(2) + re-pad (padding=1 for conv2) baked into a constant 0.5 matrix.
    h1p = jnp.dot(h1, p1_ref[...], preferred_element_type=jnp.float32)   # (Bt, 128)
    # Conv1d(8, 14, k=3, p=1) + bias + sigmoid.
    h2 = jax.nn.sigmoid(
        jnp.dot(h1p, m2_ref[...], preferred_element_type=jnp.float32) + b2_ref[...])
    # AvgPool1d(2) + channel-major flatten (== nn.Flatten) -> features.
    fea = jnp.dot(h2, p2_ref[...], preferred_element_type=jnp.float32)   # (Bt, 128)
    # Fused adapter head: Linear(98, 64), zero-padded to (128, 128).
    hint = jnp.dot(fea, wa_ref[...], preferred_element_type=jnp.float32) + ba_ref[...]
    fea_ref[...] = fea.astype(fea_ref.dtype)
    hint_ref[...] = hint.astype(hint_ref.dtype)


def _build_gemm_operands(params):
    """Build the constant GEMM operands (done once per call, cheap XLA glue)."""
    w1 = params["conv1_w"].astype(jnp.float32)   # (8, C, 4)
    b1 = params["conv1_b"].astype(jnp.float32)   # (8,)
    w2 = params["conv2_w"].astype(jnp.float32)   # (14, 8, 3)
    b2 = params["conv2_b"].astype(jnp.float32)   # (14,)
    wa = params["adapter_w"].astype(jnp.float32)  # (64, 98)
    ba = params["adapter_b"].astype(jnp.float32)  # (64,)

    c_in = w1.shape[1]
    kc1 = c_in * LP1
    kc1_pad = _round_up(kc1, 128)

    # --- conv1 as GEMM: Toeplitz matrix (kc1_pad, N1_PAD). ---
    o = jnp.arange(C1)[:, None, None, None]
    c = jnp.arange(c_in)[None, :, None, None]
    k = jnp.arange(K1)[None, None, :, None]
    l = jnp.arange(L1)[None, None, None, :]
    shp = (C1, c_in, K1, L1)
    rows = jnp.broadcast_to(c * LP1 + l + k, shp).reshape(-1)
    cols = jnp.broadcast_to(o * L1 + l, shp).reshape(-1)
    vals = jnp.broadcast_to(w1[:, :, :, None], shp).reshape(-1)
    m1 = jnp.zeros((kc1_pad, N1_PAD), jnp.float32).at[rows, cols].add(vals)
    b1_row = jnp.pad(jnp.repeat(b1, L1), (0, N1_PAD - N1)).reshape(1, N1_PAD)

    # --- avgpool(2) + conv2 zero re-pad folded into one (N1_PAD, 128) matrix. ---
    ch = jnp.arange(C1)[:, None]
    p = jnp.arange(P1_LEN)[None, :]
    dst = (ch * LP2 + p + 1).reshape(-1)
    p1 = jnp.zeros((N1_PAD, KC2), jnp.float32)
    p1 = p1.at[(ch * L1 + 2 * p).reshape(-1), dst].add(0.5)
    p1 = p1.at[(ch * L1 + 2 * p + 1).reshape(-1), dst].add(0.5)

    # --- conv2 as GEMM: Toeplitz matrix (128, N2_PAD). ---
    o2 = jnp.arange(C2)[:, None, None, None]
    c2 = jnp.arange(C1)[None, :, None, None]
    k2 = jnp.arange(K2)[None, None, :, None]
    l2 = jnp.arange(L2)[None, None, None, :]
    shp2 = (C2, C1, K2, L2)
    rows2 = jnp.broadcast_to(c2 * LP2 + l2 + k2, shp2).reshape(-1)
    cols2 = jnp.broadcast_to(o2 * L2 + l2, shp2).reshape(-1)
    vals2 = jnp.broadcast_to(w2[:, :, :, None], shp2).reshape(-1)
    m2 = jnp.zeros((KC2, N2_PAD), jnp.float32).at[rows2, cols2].add(vals2)
    b2_row = jnp.pad(jnp.repeat(b2, L2), (0, N2_PAD - N2)).reshape(1, N2_PAD)

    # --- avgpool(2) -> flattened features (channel-major, == nn.Flatten order). ---
    ch2 = jnp.arange(C2)[:, None]
    q = jnp.arange(P2_LEN)[None, :]
    d2 = (ch2 * P2_LEN + q).reshape(-1)
    p2 = jnp.zeros((N2_PAD, FEAT_PAD), jnp.float32)
    p2 = p2.at[(ch2 * L2 + 2 * q).reshape(-1), d2].add(0.5)
    p2 = p2.at[(ch2 * L2 + 2 * q + 1).reshape(-1), d2].add(0.5)

    # --- adapter Linear(98, 64), zero-padded to (128, 128). ---
    wa_m = jnp.zeros((FEAT_PAD, HINT_PAD), jnp.float32).at[:FEAT, :HINT_DIM].set(wa.T)
    ba_row = jnp.pad(ba, (0, HINT_PAD - HINT_DIM)).reshape(1, HINT_PAD)

    return kc1_pad, (m1, b1_row, p1, m2, b2_row, p2, wa_m, ba_row)


def generator_forward(src, params, *, block_b=256):
    B, c_in, L = src.shape
    assert L == SEQ_LEN, f"seq_len must be {SEQ_LEN} (Linear(98, 64) constraint)"

    kc1_pad, ops = _build_gemm_operands(params)

    # Batch tile: big enough to amortize per-step overhead, rounded to sublanes.
    bt = min(block_b, _round_up(B, 8))
    bp = _round_up(B, bt)

    # One-time layout glue: zero-pad the sequence (conv padding=1), flatten each
    # example to a (channel*length) row, lane-pad to a multiple of 128, batch-pad
    # to a multiple of the batch tile.
    x = jnp.pad(src.astype(jnp.float32), ((0, bp - B), (0, 0), (1, 1)))  # (bp, C, 32)
    x = x.reshape(bp, c_in * LP1)
    x = jnp.pad(x, ((0, 0), (0, kc1_pad - c_in * LP1)))                  # (bp, kc1_pad)

    const = lambda i: (0, 0)
    feat_p, hint_p = pl.pallas_call(
        _generator_kernel,
        out_shape=(jax.ShapeDtypeStruct((bp, FEAT_PAD), jnp.float32),
                   jax.ShapeDtypeStruct((bp, HINT_PAD), jnp.float32)),
        grid=(bp // bt,),
        in_specs=[
            pl.BlockSpec((bt, kc1_pad), lambda i: (i, 0)),   # batch tile of inputs
            pl.BlockSpec((kc1_pad, N1_PAD), const),          # conv1 Toeplitz
            pl.BlockSpec((1, N1_PAD), const),                # conv1 bias row
            pl.BlockSpec((N1_PAD, KC2), const),              # pool1 + re-pad matrix
            pl.BlockSpec((KC2, N2_PAD), const),              # conv2 Toeplitz
            pl.BlockSpec((1, N2_PAD), const),                # conv2 bias row
            pl.BlockSpec((N2_PAD, FEAT_PAD), const),         # pool2 / flatten matrix
            pl.BlockSpec((FEAT_PAD, HINT_PAD), const),       # adapter weight (padded)
            pl.BlockSpec((1, HINT_PAD), const),              # adapter bias row
        ],
        out_specs=(pl.BlockSpec((bt, FEAT_PAD), lambda i: (i, 0)),
                   pl.BlockSpec((bt, HINT_PAD), lambda i: (i, 0))),
        compiler_params=pltpu.CompilerParams(
            dimension_semantics=("parallel",)),
    )(x, *ops)

    fea = feat_p[:B, :FEAT]          # strip batch + lane padding (cheap glue)
    hint = hint_p[:B, :HINT_DIM]
    return fea, hint


def _ref_forward(src, params):
    """Pure-JAX reference (XLA conv) for correctness checking."""
    def conv1d(x, w, b, pad):
        y = jax.lax.conv_general_dilated(
            x, w, window_strides=(1,), padding=[(pad, pad)],
            dimension_numbers=("NCW", "OIW", "NCW"))
        return y + b[None, :, None]

    def avgpool2(x):
        n = x.shape[-1] // 2
        return x[..., :2 * n].reshape(x.shape[0], x.shape[1], n, 2).mean(-1)

    y = jax.nn.sigmoid(conv1d(src, params["conv1_w"], params["conv1_b"], 1))
    y = avgpool2(y)
    y = jax.nn.sigmoid(conv1d(y, params["conv2_w"], params["conv2_b"], 1))
    y = avgpool2(y)
    fea = y.reshape(y.shape[0], -1)
    hint = fea @ params["adapter_w"].T + params["adapter_b"]
    return fea, hint


def init_params(key, input_dim):
    ks = jax.random.split(key, 6)
    s = 0.2
    return {
        "conv1_w": s * jax.random.normal(ks[0], (C1, input_dim, K1), jnp.float32),
        "conv1_b": s * jax.random.normal(ks[1], (C1,), jnp.float32),
        "conv2_w": s * jax.random.normal(ks[2], (C2, C1, K2), jnp.float32),
        "conv2_b": s * jax.random.normal(ks[3], (C2,), jnp.float32),
        "adapter_w": s * jax.random.normal(ks[4], (HINT_DIM, FEAT), jnp.float32),
        "adapter_b": s * jax.random.normal(ks[5], (HINT_DIM,), jnp.float32),
    }


if __name__ == "__main__":
    key = jax.random.PRNGKey(0)
    pkey, xkey = jax.random.split(key)
    params = init_params(pkey, INPUT_DIM)
    src = jax.random.normal(xkey, (2, INPUT_DIM, SEQ_LEN), jnp.float32)

    fwd = jax.jit(generator_forward)
    fea, hint = fwd(src, params)
    jax.block_until_ready((fea, hint))

    assert fea.shape == (2, FEAT) and hint.shape == (2, HINT_DIM)

    rf, rh = _ref_forward(src, params)
    assert jnp.allclose(fea, rf, rtol=1e-4, atol=1e-4)
    assert jnp.allclose(hint, rh, rtol=1e-4, atol=1e-4)

    print("KERNEL_OK")
</pallas_src>

<mosaic_0001>
module attributes {stable_mosaic.version = 11 : i64} {
  func.func private @main(%arg0: i32) attributes {dimension_semantics = [#tpu.dimension_semantics<core_parallel>], iteration_bounds = array<i64: 2>, tpu.core_type = #tpu.core_type<sc_scalar_subcore>, window_params = []} {
    return
  }
}

module attributes {stable_mosaic.version = 11 : i64} {
  func.func private @main(%arg0: i32) attributes {dimension_semantics = [#tpu.dimension_semantics<core_parallel>], iteration_bounds = array<i64: 2>, tpu.core_type = #tpu.core_type<sc_scalar_subcore>, window_params = []} {
    return
  }
}

module attributes {stable_mosaic.version = 11 : i64} {
  func.func @_generator_kernel(%arg0: i32, %arg1: memref<8x512xf32, #tpu.memory_space<vmem>>, %arg2: memref<512x256xf32, #tpu.memory_space<vmem>>, %arg3: memref<1x256xf32, #tpu.memory_space<vmem>>, %arg4: memref<256x128xf32, #tpu.memory_space<vmem>>, %arg5: memref<128x256xf32, #tpu.memory_space<vmem>>, %arg6: memref<1x256xf32, #tpu.memory_space<vmem>>, %arg7: memref<256x128xf32, #tpu.memory_space<vmem>>, %arg8: memref<128x128xf32, #tpu.memory_space<vmem>>, %arg9: memref<1x128xf32, #tpu.memory_space<vmem>>, %arg10: memref<8x128xf32, #tpu.memory_space<vmem>>, %arg11: memref<8x128xf32, #tpu.memory_space<vmem>>) attributes {dimension_semantics = [#tpu.dimension_semantics<parallel>], iteration_bounds = array<i64: 1>, scalar_prefetch = 0 : i64, scratch_operands = 0 : i64, tpu.core_type = #tpu.core_type<tc>, window_params = [{transform_indices = @transform_0, window_bounds = array<i64: 8, 512>}, {pipeline_mode = #tpu.pipeline_mode<synchronous>, transform_indices = @transform_1, window_bounds = array<i64: 512, 256>}, {pipeline_mode = #tpu.pipeline_mode<synchronous>, transform_indices = @transform_2, window_bounds = array<i64: 1, 256>}, {pipeline_mode = #tpu.pipeline_mode<synchronous>, transform_indices = @transform_3, window_bounds = array<i64: 256, 128>}, {pipeline_mode = #tpu.pipeline_mode<synchronous>, transform_indices = @transform_4, window_bounds = array<i64: 128, 256>}, {pipeline_mode = #tpu.pipeline_mode<synchronous>, transform_indices = @transform_5, window_bounds = array<i64: 1, 256>}, {pipeline_mode = #tpu.pipeline_mode<synchronous>, transform_indices = @transform_6, window_bounds = array<i64: 256, 128>}, {pipeline_mode = #tpu.pipeline_mode<synchronous>, transform_indices = @transform_7, window_bounds = array<i64: 128, 128>}, {pipeline_mode = #tpu.pipeline_mode<synchronous>, transform_indices = @transform_8, window_bounds = array<i64: 1, 128>}, {transform_indices = @transform_9, window_bounds = array<i64: 8, 128>}, {transform_indices = @transform_10, window_bounds = array<i64: 8, 128>}]} {
    %c0 = arith.constant 0 : index
    %c0_0 = arith.constant 0 : index
    %0 = vector.load %arg1[%c0, %c0_0] : memref<8x512xf32, #tpu.memory_space<vmem>>, vector<8x512xf32>
    %c0_1 = arith.constant 0 : index
    %c0_2 = arith.constant 0 : index
    %1 = vector.load %arg2[%c0_1, %c0_2] : memref<512x256xf32, #tpu.memory_space<vmem>>, vector<512x256xf32>
    %cst = arith.constant dense<0.000000e+00> : vector<8x256xf32>
    %2 = tpu.matmul %0, %1, %cst {dimension_numbers = #tpu.dot_dimension_numbers<[1], [0], [0], [1], [0, 0, 1, 1], [], []>} : vector<8x512xf32>, vector<512x256xf32>, vector<8x256xf32> -> vector<8x256xf32>
    %c0_3 = arith.constant 0 : index
    %c0_4 = arith.constant 0 : index
    %3 = vector.load %arg3[%c0_3, %c0_4] : memref<1x256xf32, #tpu.memory_space<vmem>>, vector<1x256xf32>
    %4 = vector.broadcast %3 : vector<1x256xf32> to vector<8x256xf32>
    %5 = arith.addf %2, %4 : vector<8x256xf32>
    %6 = arith.negf %5 : vector<8x256xf32>
    %7 = math.exp %6 : vector<8x256xf32>
    %cst_5 = arith.constant 1.000000e+00 : f32
    %8 = vector.broadcast %cst_5 : f32 to vector<8x256xf32>
    %9 = arith.addf %8, %7 : vector<8x256xf32>
    %10 = arith.divf %8, %9 : vector<8x256xf32>
    %c0_6 = arith.constant 0 : index
    %c0_7 = arith.constant 0 : index
    %11 = vector.load %arg4[%c0_6, %c0_7] : memref<256x128xf32, #tpu.memory_space<vmem>>, vector<256x128xf32>
    %cst_8 = arith.constant dense<0.000000e+00> : vector<8x128xf32>
    %12 = tpu.matmul %10, %11, %cst_8 {dimension_numbers = #tpu.dot_dimension_numbers<[1], [0], [0], [1], [0, 0, 1, 1], [], []>} : vector<8x256xf32>, vector<256x128xf32>, vector<8x128xf32> -> vector<8x128xf32>
    %c0_9 = arith.constant 0 : index
    %c0_10 = arith.constant 0 : index
    %13 = vector.load %arg5[%c0_9, %c0_10] : memref<128x256xf32, #tpu.memory_space<vmem>>, vector<128x256xf32>
    %cst_11 = arith.constant dense<0.000000e+00> : vector<8x256xf32>
    %14 = tpu.matmul %12, %13, %cst_11 {dimension_numbers = #tpu.dot_dimension_numbers<[1], [0], [0], [1], [0, 0, 1, 1], [], []>} : vector<8x128xf32>, vector<128x256xf32>, vector<8x256xf32> -> vector<8x256xf32>
    %c0_12 = arith.constant 0 : index
    %c0_13 = arith.constant 0 : index
    %15 = vector.load %arg6[%c0_12, %c0_13] : memref<1x256xf32, #tpu.memory_space<vmem>>, vector<1x256xf32>
    %16 = vector.broadcast %15 : vector<1x256xf32> to vector<8x256xf32>
    %17 = arith.addf %14, %16 : vector<8x256xf32>
    %18 = arith.negf %17 : vector<8x256xf32>
    %19 = math.exp %18 : vector<8x256xf32>
    %cst_14 = arith.constant 1.000000e+00 : f32
    %20 = vector.broadcast %cst_14 : f32 to vector<8x256xf32>
    %21 = arith.addf %20, %19 : vector<8x256xf32>
    %22 = arith.divf %20, %21 : vector<8x256xf32>
    %c0_15 = arith.constant 0 : index
    %c0_16 = arith.constant 0 : index
    %23 = vector.load %arg7[%c0_15, %c0_16] : memref<256x128xf32, #tpu.memory_space<vmem>>, vector<256x128xf32>
    %cst_17 = arith.constant dense<0.000000e+00> : vector<8x128xf32>
    %24 = tpu.matmul %22, %23, %cst_17 {dimension_numbers = #tpu.dot_dimension_numbers<[1], [0], [0], [1], [0, 0, 1, 1], [], []>} : vector<8x256xf32>, vector<256x128xf32>, vector<8x128xf32> -> vector<8x128xf32>
    %c0_18 = arith.constant 0 : index
    %c0_19 = arith.constant 0 : index
    %25 = vector.load %arg8[%c0_18, %c0_19] : memref<128x128xf32, #tpu.memory_space<vmem>>, vector<128x128xf32>
    %cst_20 = arith.constant dense<0.000000e+00> : vector<8x128xf32>
    %26 = tpu.matmul %24, %25, %cst_20 {dimension_numbers = #tpu.dot_dimension_numbers<[1], [0], [0], [1], [0, 0, 1, 1], [], []>} : vector<8x128xf32>, vector<128x128xf32>, vector<8x128xf32> -> vector<8x128xf32>
    %c0_21 = arith.constant 0 : index
    %c0_22 = arith.constant 0 : index
    %27 = vector.load %arg9[%c0_21, %c0_22] : memref<1x128xf32, #tpu.memory_space<vmem>>, vector<1x128xf32>
    %28 = vector.broadcast %27 : vector<1x128xf32> to vector<8x128xf32>
    %29 = arith.addf %26, %28 : vector<8x128xf32>
    %c0_23 = arith.constant 0 : index
    %c0_24 = arith.constant 0 : index
    %30 = vector.load %arg10[%c0_23, %c0_24] : memref<8x128xf32, #tpu.memory_space<vmem>>, vector<8x128xf32>
    tpu.vector_store %arg10[%c0_23, %c0_24], %24 {strides = array<i32>} : memref<8x128xf32, #tpu.memory_space<vmem>>, vector<8x128xf32>,
    %c0_25 = arith.constant 0 : index
    %c0_26 = arith.constant 0 : index
    %31 = vector.load %arg11[%c0_25, %c0_26] : memref<8x128xf32, #tpu.memory_space<vmem>>, vector<8x128xf32>
    tpu.vector_store %arg11[%c0_25, %c0_26], %29 {strides = array<i32>} : memref<8x128xf32, #tpu.memory_space<vmem>>, vector<8x128xf32>,
    return
  }
  func.func @transform_0(%arg0: i32) -> (i32, i32) {
    %c0_i32 = arith.constant 0 : i32
    %c0_i32_0 = arith.constant 0 : i32
    return %arg0, %c0_i32 : i32, i32
  }
  func.func @transform_1(%arg0: i32) -> (i32, i32) {
    %c0_i32 = arith.constant 0 : i32
    %c0_i32_0 = arith.constant 0 : i32
    %c0_i32_1 = arith.constant 0 : i32
    return %c0_i32, %c0_i32_0 : i32, i32
  }
  func.func @transform_2(%arg0: i32) -> (i32, i32) {
    %c0_i32 = arith.constant 0 : i32
    %c0_i32_0 = arith.constant 0 : i32
    %c0_i32_1 = arith.constant 0 : i32
    return %c0_i32, %c0_i32_0 : i32, i32
  }
  func.func @transform_3(%arg0: i32) -> (i32, i32) {
    %c0_i32 = arith.constant 0 : i32
    %c0_i32_0 = arith.constant 0 : i32
    %c0_i32_1 = arith.constant 0 : i32
    return %c0_i32, %c0_i32_0 : i32, i32
  }
  func.func @transform_4(%arg0: i32) -> (i32, i32) {
    %c0_i32 = arith.constant 0 : i32
    %c0_i32_0 = arith.constant 0 : i32
    %c0_i32_1 = arith.constant 0 : i32
    return %c0_i32, %c0_i32_0 : i32, i32
  }
  func.func @transform_5(%arg0: i32) -> (i32, i32) {
    %c0_i32 = arith.constant 0 : i32
    %c0_i32_0 = arith.constant 0 : i32
    %c0_i32_1 = arith.constant 0 : i32
    return %c0_i32, %c0_i32_0 : i32, i32
  }
  func.func @transform_6(%arg0: i32) -> (i32, i32) {
    %c0_i32 = arith.constant 0 : i32
    %c0_i32_0 = arith.constant 0 : i32
    %c0_i32_1 = arith.constant 0 : i32
    return %c0_i32, %c0_i32_0 : i32, i32
  }
  func.func @transform_7(%arg0: i32) -> (i32, i32) {
    %c0_i32 = arith.constant 0 : i32
    %c0_i32_0 = arith.constant 0 : i32
    %c0_i32_1 = arith.constant 0 : i32
    return %c0_i32, %c0_i32_0 : i32, i32
  }
  func.func @transform_8(%arg0: i32) -> (i32, i32) {
    %c0_i32 = arith.constant 0 : i32
    %c0_i32_0 = arith.constant 0 : i32
    %c0_i32_1 = arith.constant 0 : i32
    return %c0_i32, %c0_i32_0 : i32, i32
  }
  func.func @transform_9(%arg0: i32) -> (i32, i32) {
    %c0_i32 = arith.constant 0 : i32
    %c0_i32_0 = arith.constant 0 : i32
    return %arg0, %c0_i32 : i32, i32
  }
  func.func @transform_10(%arg0: i32) -> (i32, i32) {
    %c0_i32 = arith.constant 0 : i32
    %c0_i32_0 = arith.constant 0 : i32
    return %arg0, %c0_i32 : i32, i32
  }
}

</mosaic_0001>

<llo_original>
// kernel: generator_forward.1
$region0: #{generator_forward.1}
  #allocation0 [shape = 'u32[]', space=smem, size = 0x4, offset = 0x4, fixed_abs, tag = 'smem constant byte address 0x4 - core index']
  #allocation1 [shape = 'u32[144,128]{1,0:T(1,128)}', space=vmem, size = 0x12000, scoped, tag = 'internal scratch']
  %s0 = inlined_call_operand.vmem [shape: f32[8,512], index: 0, kind: input, shape index: {}]
  %s1 = inlined_call_operand.vmem [shape: f32[512,256], index: 1, kind: input, shape index: {}]
  %s2 = inlined_call_operand.vmem [shape: f32[1,256], index: 2, kind: input, shape index: {}]
  %s3 = inlined_call_operand.hbm [shape: f32[256,128], index: 3, kind: input, shape index: {}]
  %s4 = inlined_call_operand.vmem [shape: f32[128,256], index: 4, kind: input, shape index: {}]
  %s5 = inlined_call_operand.vmem [shape: f32[1,256], index: 5, kind: input, shape index: {}]
  %s6 = inlined_call_operand.vmem [shape: f32[256,128], index: 6, kind: input, shape index: {}]
  %s7 = inlined_call_operand.vmem [shape: f32[128,128], index: 7, kind: input, shape index: {}]
  %s8 = inlined_call_operand.vmem [shape: f32[1,128], index: 8, kind: input, shape index: {}]
  %s9 = inlined_call_operand.vmem [shape: f32[8,128], index: 9, kind: output, shape index: {0}]
  %s10 = inlined_call_operand.vmem [shape: f32[8,128], index: 10, kind: output, shape index: {1}]
  %11 = xla_tuple %s9, %s10
  %s12 = sld [smem:[#allocation0]]
  $region58: #{generator_forward.1} parent=0
    _
  %s14 = ssub.s32 1, %s12
  %s15 = scalar_select 0, %s14, %s12
  $region1: #{generator_forward.1} parent=0
    #allocation2 [shape = 'u8[131072]{0}', space=vmem, size = 0x20000, scoped, tag = 'input window, operand 3, single buffered']
    #allocation3 [shape = 's32[1]{0}', space=sflag, size = 0x4, scoped, tag = 'scoped memory for generator_forward.1']
    %16 = vsyncpa [#allocation3], 0
    // Predicated region
    $region2: #{generator_forward.1} parent=1 // pred_check
      _
    $region3: #{generator_forward.1} parent=1 // pred_check_branch
      %18 = sbr.rel (0) target = $region5
    $region4: #{generator_forward.1} parent=1 // pred_region
      _
    $region5: #{generator_forward.1} parent=1 // pred_fallthru
      _
    // Predicated region
    $region6: #{generator_forward.1} parent=1 // pred_check
      _
    $region7: #{generator_forward.1} parent=1 // pred_check_branch
      %20 = sbr.rel (0) target = $region9
    $region8: #{generator_forward.1} parent=1 // pred_region
      _
    $region9: #{generator_forward.1} parent=1 // pred_fallthru
      _
    // Predicated region
    $region10: #{generator_forward.1} parent=1 // pred_check
      _
    $region11: #{generator_forward.1} parent=1 // pred_check_branch
      %22 = sbr.rel (0) target = $region13
    $region12: #{generator_forward.1} parent=1 // pred_region
      _
    $region13: #{generator_forward.1} parent=1 // pred_fallthru
      _
    // Predicated region
    $region14: #{generator_forward.1} parent=1 // pred_check
      _
    $region15: #{generator_forward.1} parent=1 // pred_check_branch
      %24 = sbr.rel (0) target = $region17
    $region16: #{generator_forward.1} parent=1 // pred_region
      %s26 = ssub.s32 4096, 4096
      %27 = vsyncadd [#allocation3], %s26
      %s28 = sshll.u32 [#allocation2], 4
      %s29 = int_to_ptr.vmem [resolvable:$true] %s28
      %34 = dma.hbm_to_vmem [thread:$0]  %s3, 4096, %s29, [#allocation3], 128, 128, 8
    $region17: #{generator_forward.1} parent=1 // pred_fallthru
      _
    // Predicated region
    $region18: #{generator_forward.1} parent=1 // pred_check
      _
    $region19: #{generator_forward.1} parent=1 // pred_check_branch
      %36 = sbr.rel (0) target = $region21
    $region20: #{generator_forward.1} parent=1 // pred_region
      _
    $region21: #{generator_forward.1} parent=1 // pred_fallthru
      _
    // Predicated region
    $region22: #{generator_forward.1} parent=1 // pred_check
      _
    $region23: #{generator_forward.1} parent=1 // pred_check_branch
      %38 = sbr.rel (0) target = $region25
    $region24: #{generator_forward.1} parent=1 // pred_region
      _
    $region25: #{generator_forward.1} parent=1 // pred_fallthru
      _
    // Predicated region
    $region26: #{generator_forward.1} parent=1 // pred_check
      _
    $region27: #{generator_forward.1} parent=1 // pred_check_branch
      %40 = sbr.rel (0) target = $region29
    $region28: #{generator_forward.1} parent=1 // pred_region
      _
    $region29: #{generator_forward.1} parent=1 // pred_fallthru
      _
    // Predicated region
    $region30: #{generator_forward.1} parent=1 // pred_check
      _
    $region31: #{generator_forward.1} parent=1 // pred_check_branch
      %42 = sbr.rel (0) target = $region33
    $region32: #{generator_forward.1} parent=1 // pred_region
      _
    $region33: #{generator_forward.1} parent=1 // pred_fallthru
      _
    // Predicated region
    $region34: #{generator_forward.1} parent=1 // pred_check
      _
    $region35: #{generator_forward.1} parent=1 // pred_check_branch
      %44 = sbr.rel (0) target = $region37
    $region36: #{generator_forward.1} parent=1 // pred_region
      _
    $region37: #{generator_forward.1} parent=1 // pred_fallthru
      _
    // Predicated region
    $region38: #{generator_forward.1} parent=1 // pred_check
      _
    $region39: #{generator_forward.1} parent=1 // pred_check_branch
      %46 = sbr.rel (0) target = $region41
    $region40: #{generator_forward.1} parent=1 // pred_region
      %47 = dma.done [#allocation3], 4096
    $region41: #{generator_forward.1} parent=1 // pred_fallthru
      _
    %v48 = vld [vmem:[%s0] sm:$0xff]
    %v49 = vld [vmem:[%s0 + $0x8] sm:$0xff]
    %v50 = vld [vmem:[%s0 + $0x10] sm:$0xff]
    %v51 = vld [vmem:[%s0 + $0x18] sm:$0xff]
    %v52 = vld [vmem:[%s1] sm:$0xff]
    %v53 = vld [vmem:[%s1 + $0x8] sm:$0xff]
    %v54 = vld [vmem:[%s1 + $0x10] sm:$0xff]
    %v55 = vld [vmem:[%s1 + $0x18] sm:$0xff]
    %v56 = vld [vmem:[%s1 + $0x20] sm:$0xff]
    %v57 = vld [vmem:[%s1 + $0x28] sm:$0xff]
    %v58 = vld [vmem:[%s1 + $0x30] sm:$0xff]
    %v59 = vld [vmem:[%s1 + $0x38] sm:$0xff]
    %v60 = vld [vmem:[%s1 + $0x40] sm:$0xff]
    %v61 = vld [vmem:[%s1 + $0x48] sm:$0xff]
    %v62 = vld [vmem:[%s1 + $0x50] sm:$0xff]
    %v63 = vld [vmem:[%s1 + $0x58] sm:$0xff]
    %v64 = vld [vmem:[%s1 + $0x60] sm:$0xff]
    %v65 = vld [vmem:[%s1 + $0x68] sm:$0xff]
    %v66 = vld [vmem:[%s1 + $0x70] sm:$0xff]
    %v67 = vld [vmem:[%s1 + $0x78] sm:$0xff]
    %v68 = vld [vmem:[%s1 + $0x80] sm:$0xff]
    %v69 = vld [vmem:[%s1 + $0x88] sm:$0xff]
    %v70 = vld [vmem:[%s1 + $0x90] sm:$0xff]
    %v71 = vld [vmem:[%s1 + $0x98] sm:$0xff]
    %v72 = vld [vmem:[%s1 + $0xa0] sm:$0xff]
    %v73 = vld [vmem:[%s1 + $0xa8] sm:$0xff]
    %v74 = vld [vmem:[%s1 + $0xb0] sm:$0xff]
    %v75 = vld [vmem:[%s1 + $0xb8] sm:$0xff]
    %v76 = vld [vmem:[%s1 + $0xc0] sm:$0xff]
    %v77 = vld [vmem:[%s1 + $0xc8] sm:$0xff]
    %v78 = vld [vmem:[%s1 + $0xd0] sm:$0xff]
    %v79 = vld [vmem:[%s1 + $0xd8] sm:$0xff]
    %v80 = vld [vmem:[%s1 + $0xe0] sm:$0xff]
    %v81 = vld [vmem:[%s1 + $0xe8] sm:$0xff]
    %v82 = vld [vmem:[%s1 + $0xf0] sm:$0xff]
    %v83 = vld [vmem:[%s1 + $0xf8] sm:$0xff]
    %v84 = vld [vmem:[%s1 + $0x100] sm:$0xff]
    %v85 = vld [vmem:[%s1 + $0x108] sm:$0xff]
    %v86 = vld [vmem:[%s1 + $0x110] sm:$0xff]
    %v87 = vld [vmem:[%s1 + $0x118] sm:$0xff]
    %v88 = vld [vmem:[%s1 + $0x120] sm:$0xff]
    %v89 = vld [vmem:[%s1 + $0x128] sm:$0xff]
    %v90 = vld [vmem:[%s1 + $0x130] sm:$0xff]
    %v91 = vld [vmem:[%s1 + $0x138] sm:$0xff]
    %v92 = vld [vmem:[%s1 + $0x140] sm:$0xff]
    %v93 = vld [vmem:[%s1 + $0x148] sm:$0xff]
    %v94 = vld [vmem:[%s1 + $0x150] sm:$0xff]
    %v95 = vld [vmem:[%s1 + $0x158] sm:$0xff]
    %v96 = vld [vmem:[%s1 + $0x160] sm:$0xff]
    %v97 = vld [vmem:[%s1 + $0x168] sm:$0xff]
    %v98 = vld [vmem:[%s1 + $0x170] sm:$0xff]
    %v99 = vld [vmem:[%s1 + $0x178] sm:$0xff]
    %v100 = vld [vmem:[%s1 + $0x180] sm:$0xff]
    %v101 = vld [vmem:[%s1 + $0x188] sm:$0xff]
    %v102 = vld [vmem:[%s1 + $0x190] sm:$0xff]
    %v103 = vld [vmem:[%s1 + $0x198] sm:$0xff]
    %v104 = vld [vmem:[%s1 + $0x1a0] sm:$0xff]
    %v105 = vld [vmem:[%s1 + $0x1a8] sm:$0xff]
    %v106 = vld [vmem:[%s1 + $0x1b0] sm:$0xff]
    %v107 = vld [vmem:[%s1 + $0x1b8] sm:$0xff]
    %v108 = vld [vmem:[%s1 + $0x1c0] sm:$0xff]
    %v109 = vld [vmem:[%s1 + $0x1c8] sm:$0xff]
    %v110 = vld [vmem:[%s1 + $0x1d0] sm:$0xff]
    %v111 = vld [vmem:[%s1 + $0x1d8] sm:$0xff]
    %v112 = vld [vmem:[%s1 + $0x1e0] sm:$0xff]
    %v113 = vld [vmem:[%s1 + $0x1e8] sm:$0xff]
    %v114 = vld [vmem:[%s1 + $0x1f0] sm:$0xff]
    %v115 = vld [vmem:[%s1 + $0x1f8] sm:$0xff]
    %v116 = vld [vmem:[%s1 + $0x200] sm:$0xff]
    %v117 = vld [vmem:[%s1 + $0x208] sm:$0xff]
    %v118 = vld [vmem:[%s1 + $0x210] sm:$0xff]
    %v119 = vld [vmem:[%s1 + $0x218] sm:$0xff]
    %v120 = vld [vmem:[%s1 + $0x220] sm:$0xff]
    %v121 = vld [vmem:[%s1 + $0x228] sm:$0xff]
    %v122 = vld [vmem:[%s1 + $0x230] sm:$0xff]
    %v123 = vld [vmem:[%s1 + $0x238] sm:$0xff]
    %v124 = vld [vmem:[%s1 + $0x240] sm:$0xff]
    %v125 = vld [vmem:[%s1 + $0x248] sm:$0xff]
    %v126 = vld [vmem:[%s1 + $0x250] sm:$0xff]
    %v127 = vld [vmem:[%s1 + $0x258] sm:$0xff]
    %v128 = vld [vmem:[%s1 + $0x260] sm:$0xff]
    %v129 = vld [vmem:[%s1 + $0x268] sm:$0xff]
    %v130 = vld [vmem:[%s1 + $0x270] sm:$0xff]
    %v131 = vld [vmem:[%s1 + $0x278] sm:$0xff]
    %v132 = vld [vmem:[%s1 + $0x280] sm:$0xff]
    %v133 = vld [vmem:[%s1 + $0x288] sm:$0xff]
    %v134 = vld [vmem:[%s1 + $0x290] sm:$0xff]
    %v135 = vld [vmem:[%s1 + $0x298] sm:$0xff]
    %v136 = vld [vmem:[%s1 + $0x2a0] sm:$0xff]
    %v137 = vld [vmem:[%s1 + $0x2a8] sm:$0xff]
    %v138 = vld [vmem:[%s1 + $0x2b0] sm:$0xff]
    %v139 = vld [vmem:[%s1 + $0x2b8] sm:$0xff]
    %v140 = vld [vmem:[%s1 + $0x2c0] sm:$0xff]
    %v141 = vld [vmem:[%s1 + $0x2c8] sm:$0xff]
    %v142 = vld [vmem:[%s1 + $0x2d0] sm:$0xff]
    %v143 = vld [vmem:[%s1 + $0x2d8] sm:$0xff]
    %v144 = vld [vmem:[%s1 + $0x2e0] sm:$0xff]
    %v145 = vld [vmem:[%s1 + $0x2e8] sm:$0xff]
    %v146 = vld [vmem:[%s1 + $0x2f0] sm:$0xff]
    %v147 = vld [vmem:[%s1 + $0x2f8] sm:$0xff]
    %v148 = vld [vmem:[%s1 + $0x300] sm:$0xff]
    %v149 = vld [vmem:[%s1 + $0x308] sm:$0xff]
    %v150 = vld [vmem:[%s1 + $0x310] sm:$0xff]
    %v151 = vld [vmem:[%s1 + $0x318] sm:$0xff]
    %v152 = vld [vmem:[%s1 + $0x320] sm:$0xff]
    %v153 = vld [vmem:[%s1 + $0x328] sm:$0xff]
    %v154 = vld [vmem:[%s1 + $0x330] sm:$0xff]
    %v155 = vld [vmem:[%s1 + $0x338] sm:$0xff]
    %v156 = vld [vmem:[%s1 + $0x340] sm:$0xff]
    %v157 = vld [vmem:[%s1 + $0x348] sm:$0xff]
    %v158 = vld [vmem:[%s1 + $0x350] sm:$0xff]
    %v159 = vld [vmem:[%s1 + $0x358] sm:$0xff]
    %v160 = vld [vmem:[%s1 + $0x360] sm:$0xff]
    %v161 = vld [vmem:[%s1 + $0x368] sm:$0xff]
    %v162 = vld [vmem:[%s1 + $0x370] sm:$0xff]
    %v163 = vld [vmem:[%s1 + $0x378] sm:$0xff]
    %v164 = vld [vmem:[%s1 + $0x380] sm:$0xff]
    %v165 = vld [vmem:[%s1 + $0x388] sm:$0xff]
    %v166 = vld [vmem:[%s1 + $0x390] sm:$0xff]
    %v167 = vld [vmem:[%s1 + $0x398] sm:$0xff]
    %v168 = vld [vmem:[%s1 + $0x3a0] sm:$0xff]
    %v169 = vld [vmem:[%s1 + $0x3a8] sm:$0xff]
    %v170 = vld [vmem:[%s1 + $0x3b0] sm:$0xff]
    %v171 = vld [vmem:[%s1 + $0x3b8] sm:$0xff]
    %v172 = vld [vmem:[%s1 + $0x3c0] sm:$0xff]
    %v173 = vld [vmem:[%s1 + $0x3c8] sm:$0xff]
    %v174 = vld [vmem:[%s1 + $0x3d0] sm:$0xff]
    %v175 = vld [vmem:[%s1 + $0x3d8] sm:$0xff]
    %v176 = vld [vmem:[%s1 + $0x3e0] sm:$0xff]
    %v177 = vld [vmem:[%s1 + $0x3e8] sm:$0xff]
    %v178 = vld [vmem:[%s1 + $0x3f0] sm:$0xff]
    %v179 = vld [vmem:[%s1 + $0x3f8] sm:$0xff]
    %v180 = vld [vmem:[%s2] sm:$0x3]
    %v182 = vlaneseq
    %v183 = vshrl.u32 %v182, 7
    %v184 = vsub.s32 0, %v183
    %v185 = vrot.slane %v180, %v184
    %v186 = vlaneseq
    %v187 = vshrl.u32 %v186, 7
    %v188 = vsub.s32 1, %v187
    %v189 = vrot.slane %v180, %v188
    %192 = vmatprep.subr.mxu0 %v83
    %193 = vmatpush1.msra.mxu0 %v82
    %194 = vmatprep.subr.mxu0 %v81
    %195 = vmatpush1.msra.mxu0 %v80
    %196 = vmatprep.subr.mxu0 %v79
    %197 = vmatpush1.msra.mxu0 %v78
    %198 = vmatprep.subr.mxu0 %v77
    %199 = vmatpush1.msra.mxu0 %v76
    %200 = vmatprep.subr.mxu0 %v75
    %201 = vmatpush1.msra.mxu0 %v74
    %202 = vmatprep.subr.mxu0 %v73
    %203 = vmatpush1.msra.mxu0 %v72
    %204 = vmatprep.subr.mxu0 %v71
    %205 = vmatpush1.msra.mxu0 %v70
    %206 = vmatprep.subr.mxu0 %v69
    %207 = vmatpush1.msra.mxu0 %v68
    %208 = vmatprep.subr.mxu0 %v67
    %209 = vmatpush1.msra.mxu0 %v66
    %210 = vmatprep.subr.mxu0 %v65
    %211 = vmatpush1.msra.mxu0 %v64
    %212 = vmatprep.subr.mxu0 %v63
    %213 = vmatpush1.msra.mxu0 %v62
    %214 = vmatprep.subr.mxu0 %v61
    %215 = vmatpush1.msra.mxu0 %v60
    %216 = vmatprep.subr.mxu0 %v59
    %217 = vmatpush1.msra.mxu0 %v58
    %218 = vmatprep.subr.mxu0 %v57
    %219 = vmatpush1.msra.mxu0 %v56
    %220 = vmatprep.subr.mxu0 %v55
    %221 = vmatpush1.msra.mxu0 %v54
    %222 = vmatprep.subr.mxu0 %v53
    %223 = vmatpush1.msra.mxu0 %v52
    %224 = vmatprep.subr.mxu0 %v115
    %225 = vmatpush2.msra.mxu0 %v114
    %226 = vmatprep.subr.mxu0 %v113
    %227 = vmatpush2.msra.mxu0 %v112
    %228 = vmatprep.subr.mxu0 %v111
    %229 = vmatpush2.msra.mxu0 %v110
    %230 = vmatprep.subr.mxu0 %v109
    %231 = vmatpush2.msra.mxu0 %v108
    %232 = vmatprep.subr.mxu0 %v107
    %233 = vmatpush2.msra.mxu0 %v106
    %234 = vmatprep.subr.mxu0 %v105
    %235 = vmatpush2.msra.mxu0 %v104
    %236 = vmatprep.subr.mxu0 %v103
    %237 = vmatpush2.msra.mxu0 %v102
    %238 = vmatprep.subr.mxu0 %v101
    %239 = vmatpush2.msra.mxu0 %v100
    %240 = vmatprep.subr.mxu0 %v99
    %241 = vmatpush2.msra.mxu0 %v98
    %242 = vmatprep.subr.mxu0 %v97
    %243 = vmatpush2.msra.mxu0 %v96
    %244 = vmatprep.subr.mxu0 %v95
    %245 = vmatpush2.msra.mxu0 %v94
    %246 = vmatprep.subr.mxu0 %v93
    %247 = vmatpush2.msra.mxu0 %v92
    %248 = vmatprep.subr.mxu0 %v91
    %249 = vmatpush2.msra.mxu0 %v90
    %250 = vmatprep.subr.mxu0 %v89
    %251 = vmatpush2.msra.mxu0 %v88
    %252 = vmatprep.subr.mxu0 %v87
    %253 = vmatpush2.msra.mxu0 %v86
    %254 = vmatprep.subr.mxu0 %v85
    %255 = vmatpush2.msra.mxu0 %v84
    %256 = vmatprep.mubr.f32.mxu0 %v49
    %257 = vmatmul.mubr.f32.gmra.mxu0 %v48
    %v258 = vpop.f32.mrf.mxu0
    %v259 = vadd.f32 %v185, %v258
    %v260 = vpop.f32.mrf.mxu0
    %v261 = vadd.f32 %v189, %v260
    %262 = vdwg.mxu0
    %263 = vmatprep.subr.mxu0 %v147
    %264 = vmatpush1.msra.mxu0 %v146
    %265 = vmatprep.subr.mxu0 %v145
    %266 = vmatpush1.msra.mxu0 %v144
    %267 = vmatprep.subr.mxu0 %v143
    %268 = vmatpush1.msra.mxu0 %v142
    %269 = vmatprep.subr.mxu0 %v141
    %270 = vmatpush1.msra.mxu0 %v140
    %271 = vmatprep.subr.mxu0 %v139
    %272 = vmatpush1.msra.mxu0 %v138
    %273 = vmatprep.subr.mxu0 %v137
    %274 = vmatpush1.msra.mxu0 %v136
    %275 = vmatprep.subr.mxu0 %v135
    %276 = vmatpush1.msra.mxu0 %v134
    %277 = vmatprep.subr.mxu0 %v133
    %278 = vmatpush1.msra.mxu0 %v132
    %279 = vmatprep.subr.mxu0 %v131
    %280 = vmatpush1.msra.mxu0 %v130
    %281 = vmatprep.subr.mxu0 %v129
    %282 = vmatpush1.msra.mxu0 %v128
    %283 = vmatprep.subr.mxu0 %v127
    %284 = vmatpush1.msra.mxu0 %v126
    %285 = vmatprep.subr.mxu0 %v125
    %286 = vmatpush1.msra.mxu0 %v124
    %287 = vmatprep.subr.mxu0 %v123
    %288 = vmatpush1.msra.mxu0 %v122
    %289 = vmatprep.subr.mxu0 %v121
    %290 = vmatpush1.msra.mxu0 %v120
    %291 = vmatprep.subr.mxu0 %v119
    %292 = vmatpush1.msra.mxu0 %v118
    %293 = vmatprep.subr.mxu0 %v117
    %294 = vmatpush1.msra.mxu0 %v116
    %295 = vmatprep.subr.mxu0 %v179
    %296 = vmatpush2.msra.mxu0 %v178
    %297 = vmatprep.subr.mxu0 %v177
    %298 = vmatpush2.msra.mxu0 %v176
    %299 = vmatprep.subr.mxu0 %v175
    %300 = vmatpush2.msra.mxu0 %v174
    %301 = vmatprep.subr.mxu0 %v173
    %302 = vmatpush2.msra.mxu0 %v172
    %303 = vmatprep.subr.mxu0 %v171
    %304 = vmatpush2.msra.mxu0 %v170
    %305 = vmatprep.subr.mxu0 %v169
    %306 = vmatpush2.msra.mxu0 %v168
    %307 = vmatprep.subr.mxu0 %v167
    %308 = vmatpush2.msra.mxu0 %v166
    %309 = vmatprep.subr.mxu0 %v165
    %310 = vmatpush2.msra.mxu0 %v164
    %311 = vmatprep.subr.mxu0 %v163
    %312 = vmatpush2.msra.mxu0 %v162
    %313 = vmatprep.subr.mxu0 %v161
    %314 = vmatpush2.msra.mxu0 %v160
    %315 = vmatprep.subr.mxu0 %v159
    %316 = vmatpush2.msra.mxu0 %v158
    %317 = vmatprep.subr.mxu0 %v157
    %318 = vmatpush2.msra.mxu0 %v156
    %319 = vmatprep.subr.mxu0 %v155
    %320 = vmatpush2.msra.mxu0 %v154
    %321 = vmatprep.subr.mxu0 %v153
    %322 = vmatpush2.msra.mxu0 %v152
    %323 = vmatprep.subr.mxu0 %v151
    %324 = vmatpush2.msra.mxu0 %v150
    %325 = vmatprep.subr.mxu0 %v149
    %326 = vmatpush2.msra.mxu0 %v148
    %327 = vmatprep.mubr.f32.mxu0 %v51
    %328 = vmatmul.mubr.f32.gmra.mxu0 %v50
    %v329 = vpop.f32.mrf.mxu0
    %v330 = vadd.f32 %v259, %v329
    %v331 = vpop.f32.mrf.mxu0
    %v332 = vadd.f32 %v261, %v331
    %333 = vdwg.mxu0
    %v334 = vxor.u32 %v330, 2147483648
    %v335 = vxor.u32 %v332, 2147483648
    %v336 = vmul.f32 %v334, 1.442695
    %v337 = vpow.pop %v336
    %v338 = vmul.f32 %v335, 1.442695
    %v339 = vpow.pop %v338
    %v340 = vadd.f32 %v337, 1.0
    %v341 = vadd.f32 %v339, 1.0
    %v342 = vrcp.pop %v340
    %v343 = vmul.f32 1.0, %v342
    %v344 = vrcp.pop %v341
    %v345 = vmul.f32 1.0, %v344
    %v346 = vld [vmem:[#allocation2] sm:$0xff]
    %v347 = vld [vmem:[#allocation2 + $0x8] sm:$0xff]
    %v348 = vld [vmem:[#allocation2 + $0x10] sm:$0xff]
    %v349 = vld [vmem:[#allocation2 + $0x18] sm:$0xff]
    %v350 = vld [vmem:[#allocation2 + $0x20] sm:$0xff]
    %v351 = vld [vmem:[#allocation2 + $0x28] sm:$0xff]
    %v352 = vld [vmem:[#allocation2 + $0x30] sm:$0xff]
    %v353 = vld [vmem:[#allocation2 + $0x38] sm:$0xff]
    %v354 = vld [vmem:[#allocation2 + $0x40] sm:$0xff]
    %v355 = vld [vmem:[#allocation2 + $0x48] sm:$0xff]
    %v356 = vld [vmem:[#allocation2 + $0x50] sm:$0xff]
    %v357 = vld [vmem:[#allocation2 + $0x58] sm:$0xff]
    %v358 = vld [vmem:[#allocation2 + $0x60] sm:$0xff]
    %v359 = vld [vmem:[#allocation2 + $0x68] sm:$0xff]
    %v360 = vld [vmem:[#allocation2 + $0x70] sm:$0xff]
    %v361 = vld [vmem:[#allocation2 + $0x78] sm:$0xff]
    %v362 = vld [vmem:[#allocation2 + $0x80] sm:$0xff]
    %v363 = vld [vmem:[#allocation2 + $0x88] sm:$0xff]
    %v364 = vld [vmem:[#allocation2 + $0x90] sm:$0xff]
    %v365 = vld [vmem:[#allocation2 + $0x98] sm:$0xff]
    %v366 = vld [vmem:[#allocation2 + $0xa0] sm:$0xff]
    %v367 = vld [vmem:[#allocation2 + $0xa8] sm:$0xff]
    %v368 = vld [vmem:[#allocation2 + $0xb0] sm:$0xff]
    %v369 = vld [vmem:[#allocation2 + $0xb8] sm:$0xff]
    %v370 = vld [vmem:[#allocation2 + $0xc0] sm:$0xff]
    %v371 = vld [vmem:[#allocation2 + $0xc8] sm:$0xff]
    %v372 = vld [vmem:[#allocation2 + $0xd0] sm:$0xff]
    %v373 = vld [vmem:[#allocation2 + $0xd8] sm:$0xff]
    %v374 = vld [vmem:[#allocation2 + $0xe0] sm:$0xff]
    %v375 = vld [vmem:[#allocation2 + $0xe8] sm:$0xff]
    %v376 = vld [vmem:[#allocation2 + $0xf0] sm:$0xff]
    %v377 = vld [vmem:[#allocation2 + $0xf8] sm:$0xff]
    %378 = vmatprep.subr.mxu0 0.0
    %379 = vmatpush1.msra.mxu0 %v361
    %380 = vmatprep.subr.mxu0 0.0
    %381 = vmatpush1.msra.mxu0 %v360
    %382 = vmatprep.subr.mxu0 0.0
    %383 = vmatpush1.msra.mxu0 %v359
    %384 = vmatprep.subr.mxu0 0.0
    %385 = vmatpush1.msra.mxu0 %v358
    %386 = vmatprep.subr.mxu0 0.0
    %387 = vmatpush1.msra.mxu0 %v357
    %388 = vmatprep.subr.mxu0 0.0
    %389 = vmatpush1.msra.mxu0 %v356
    %390 = vmatprep.subr.mxu0 0.0
    %391 = vmatpush1.msra.mxu0 %v355
    %392 = vmatprep.subr.mxu0 0.0
    %393 = vmatpush1.msra.mxu0 %v354
    %394 = vmatprep.subr.mxu0 0.0
    %395 = vmatpush1.msra.mxu0 %v353
    %396 = vmatprep.subr.mxu0 0.0
    %397 = vmatpush1.msra.mxu0 %v352
    %398 = vmatprep.subr.mxu0 0.0
    %399 = vmatpush1.msra.mxu0 %v351
    %400 = vmatprep.subr.mxu0 0.0
    %401 = vmatpush1.msra.mxu0 %v350
    %402 = vmatprep.subr.mxu0 0.0
    %403 = vmatpush1.msra.mxu0 %v349
    %404 = vmatprep.subr.mxu0 0.0
    %405 = vmatpush1.msra.mxu0 %v348
    %406 = vmatprep.subr.mxu0 0.0
    %407 = vmatpush1.msra.mxu0 %v347
    %408 = vmatprep.subr.mxu0 0.0
    %409 = vmatpush1.msra.mxu0 %v346
    %410 = vmatprep.subr.mxu0 0.0
    %411 = vmatpush2.msra.mxu0 %v377
    %412 = vmatprep.subr.mxu0 0.0
    %413 = vmatpush2.msra.mxu0 %v376
    %414 = vmatprep.subr.mxu0 0.0
    %415 = vmatpush2.msra.mxu0 %v375
    %416 = vmatprep.subr.mxu0 0.0
    %417 = vmatpush2.msra.mxu0 %v374
    %418 = vmatprep.subr.mxu0 0.0
    %419 = vmatpush2.msra.mxu0 %v373
    %420 = vmatprep.subr.mxu0 0.0
    %421 = vmatpush2.msra.mxu0 %v372
    %422 = vmatprep.subr.mxu0 0.0
    %423 = vmatpush2.msra.mxu0 %v371
    %424 = vmatprep.subr.mxu0 0.0
    %425 = vmatpush2.msra.mxu0 %v370
    %426 = vmatprep.subr.mxu0 0.0
    %427 = vmatpush2.msra.mxu0 %v369
    %428 = vmatprep.subr.mxu0 0.0
    %429 = vmatpush2.msra.mxu0 %v368
    %430 = vmatprep.subr.mxu0 0.0
    %431 = vmatpush2.msra.mxu0 %v367
    %432 = vmatprep.subr.mxu0 0.0
    %433 = vmatpush2.msra.mxu0 %v366
    %434 = vmatprep.subr.mxu0 0.0
    %435 = vmatpush2.msra.mxu0 %v365
    %436 = vmatprep.subr.mxu0 0.0
    %437 = vmatpush2.msra.mxu0 %v364
    %438 = vmatprep.subr.mxu0 0.0
    %439 = vmatpush2.msra.mxu0 %v363
    %440 = vmatprep.subr.mxu0 0.0
    %441 = vmatpush2.msra.mxu0 %v362
    %442 = vmatprep.mubr.f32.mxu0 %v345
    %443 = vmatmul.mubr.f32.gmra.mxu0 %v343
    %v444 = vpop.f32.mrf.mxu0
    %v445 = vadd.f32 0.0, %v444
    %v446 = vpop.f32.mrf.mxu0
    %447 = vdwg.mxu0
    %v448 = vld [vmem:[%s4] sm:$0xff]
    %v449 = vld [vmem:[%s4 + $0x8] sm:$0xff]
    %v450 = vld [vmem:[%s4 + $0x10] sm:$0xff]
    %v451 = vld [vmem:[%s4 + $0x18] sm:$0xff]
    %v452 = vld [vmem:[%s4 + $0x20] sm:$0xff]
    %v453 = vld [vmem:[%s4 + $0x28] sm:$0xff]
    %v454 = vld [vmem:[%s4 + $0x30] sm:$0xff]
    %v455 = vld [vmem:[%s4 + $0x38] sm:$0xff]
    %v456 = vld [vmem:[%s4 + $0x40] sm:$0xff]
    %v457 = vld [vmem:[%s4 + $0x48] sm:$0xff]
    %v458 = vld [vmem:[%s4 + $0x50] sm:$0xff]
    %v459 = vld [vmem:[%s4 + $0x58] sm:$0xff]
    %v460 = vld [vmem:[%s4 + $0x60] sm:$0xff]
    %v461 = vld [vmem:[%s4 + $0x68] sm:$0xff]
    %v462 = vld [vmem:[%s4 + $0x70] sm:$0xff]
    %v463 = vld [vmem:[%s4 + $0x78] sm:$0xff]
    %v464 = vld [vmem:[%s4 + $0x80] sm:$0xff]
    %v465 = vld [vmem:[%s4 + $0x88] sm:$0xff]
    %v466 = vld [vmem:[%s4 + $0x90] sm:$0xff]
    %v467 = vld [vmem:[%s4 + $0x98] sm:$0xff]
    %v468 = vld [vmem:[%s4 + $0xa0] sm:$0xff]
    %v469 = vld [vmem:[%s4 + $0xa8] sm:$0xff]
    %v470 = vld [vmem:[%s4 + $0xb0] sm:$0xff]
    %v471 = vld [vmem:[%s4 + $0xb8] sm:$0xff]
    %v472 = vld [vmem:[%s4 + $0xc0] sm:$0xff]
    %v473 = vld [vmem:[%s4 + $0xc8] sm:$0xff]
    %v474 = vld [vmem:[%s4 + $0xd0] sm:$0xff]
    %v475 = vld [vmem:[%s4 + $0xd8] sm:$0xff]
    %v476 = vld [vmem:[%s4 + $0xe0] sm:$0xff]
    %v477 = vld [vmem:[%s4 + $0xe8] sm:$0xff]
    %v478 = vld [vmem:[%s4 + $0xf0] sm:$0xff]
    %v479 = vld [vmem:[%s4 + $0xf8] sm:$0xff]
    %v480 = vld [vmem:[%s5] sm:$0x3]
    %v482 = vlaneseq
    %v483 = vshrl.u32 %v482, 7
    %v484 = vsub.s32 0, %v483
    %v485 = vrot.slane %v480, %v484
    %v486 = vlaneseq
    %v487 = vshrl.u32 %v486, 7
    %v488 = vsub.s32 1, %v487
    %v489 = vrot.slane %v480, %v488
    %492 = vmatprep.subr.mxu0 %v479
    %493 = vmatpush1.msra.mxu0 %v478
    %494 = vmatprep.subr.mxu0 %v477
    %495 = vmatpush1.msra.mxu0 %v476
    %496 = vmatprep.subr.mxu0 %v475
    %497 = vmatpush1.msra.mxu0 %v474
    %498 = vmatprep.subr.mxu0 %v473
    %499 = vmatpush1.msra.mxu0 %v472
    %500 = vmatprep.subr.mxu0 %v471
    %501 = vmatpush1.msra.mxu0 %v470
    %502 = vmatprep.subr.mxu0 %v469
    %503 = vmatpush1.msra.mxu0 %v468
    %504 = vmatprep.subr.mxu0 %v467
    %505 = vmatpush1.msra.mxu0 %v466
    %506 = vmatprep.subr.mxu0 %v465
    %507 = vmatpush1.msra.mxu0 %v464
    %508 = vmatprep.subr.mxu0 %v463
    %509 = vmatpush1.msra.mxu0 %v462
    %510 = vmatprep.subr.mxu0 %v461
    %511 = vmatpush1.msra.mxu0 %v460
    %512 = vmatprep.subr.mxu0 %v459
    %513 = vmatpush1.msra.mxu0 %v458
    %514 = vmatprep.subr.mxu0 %v457
    %515 = vmatpush1.msra.mxu0 %v456
    %516 = vmatprep.subr.mxu0 %v455
    %517 = vmatpush1.msra.mxu0 %v454
    %518 = vmatprep.subr.mxu0 %v453
    %519 = vmatpush1.msra.mxu0 %v452
    %520 = vmatprep.subr.mxu0 %v451
    %521 = vmatpush1.msra.mxu0 %v450
    %522 = vmatprep.subr.mxu0 %v449
    %523 = vmatpush1.msra.mxu0 %v448
    %524 = vmatprep.subr.mxu0 0.0
    %525 = vmatpush2.msra.mxu0 0.0
    %526 = vmatprep.subr.mxu0 0.0
    %527 = vmatpush2.msra.mxu0 0.0
    %528 = vmatprep.subr.mxu0 0.0
    %529 = vmatpush2.msra.mxu0 0.0
    %530 = vmatprep.subr.mxu0 0.0
    %531 = vmatpush2.msra.mxu0 0.0
    %532 = vmatprep.subr.mxu0 0.0
    %533 = vmatpush2.msra.mxu0 0.0
    %534 = vmatprep.subr.mxu0 0.0
    %535 = vmatpush2.msra.mxu0 0.0
    %536 = vmatprep.subr.mxu0 0.0
    %537 = vmatpush2.msra.mxu0 0.0
    %538 = vmatprep.subr.mxu0 0.0
    %539 = vmatpush2.msra.mxu0 0.0
    %540 = vmatprep.subr.mxu0 0.0
    %541 = vmatpush2.msra.mxu0 0.0
    %542 = vmatprep.subr.mxu0 0.0
    %543 = vmatpush2.msra.mxu0 0.0
    %544 = vmatprep.subr.mxu0 0.0
    %545 = vmatpush2.msra.mxu0 0.0
    %546 = vmatprep.subr.mxu0 0.0
    %547 = vmatpush2.msra.mxu0 0.0
    %548 = vmatprep.subr.mxu0 0.0
    %549 = vmatpush2.msra.mxu0 0.0
    %550 = vmatprep.subr.mxu0 0.0
    %551 = vmatpush2.msra.mxu0 0.0
    %552 = vmatprep.subr.mxu0 0.0
    %553 = vmatpush2.msra.mxu0 0.0
    %554 = vmatprep.subr.mxu0 0.0
    %555 = vmatpush2.msra.mxu0 0.0
    %556 = vmatprep.mubr.f32.mxu0 0.0
    %557 = vmatmul.mubr.f32.gmra.mxu0 %v445
    %v558 = vpop.f32.mrf.mxu0
    %v559 = vadd.f32 %v485, %v558
    %v560 = vpop.f32.mrf.mxu0
    %v561 = vadd.f32 %v489, %v560
    %562 = vdwg.mxu0
    %v563 = vxor.u32 %v559, 2147483648
    %v564 = vxor.u32 %v561, 2147483648
    %v565 = vmul.f32 %v563, 1.442695
    %v566 = vpow.pop %v565
    %v567 = vmul.f32 %v564, 1.442695
    %v568 = vpow.pop %v567
    %v569 = vadd.f32 %v566, 1.0
    %v570 = vadd.f32 %v568, 1.0
    %v571 = vrcp.pop %v569
    %v572 = vmul.f32 1.0, %v571
    %v573 = vrcp.pop %v570
    %v574 = vmul.f32 1.0, %v573
    %v575 = vld [vmem:[%s6] sm:$0xff]
    %v576 = vld [vmem:[%s6 + $0x8] sm:$0xff]
    %v577 = vld [vmem:[%s6 + $0x10] sm:$0xff]
    %v578 = vld [vmem:[%s6 + $0x18] sm:$0xff]
    %v579 = vld [vmem:[%s6 + $0x20] sm:$0xff]
    %v580 = vld [vmem:[%s6 + $0x28] sm:$0xff]
    %v581 = vld [vmem:[%s6 + $0x30] sm:$0xff]
    %v582 = vld [vmem:[%s6 + $0x38] sm:$0xff]
    %v583 = vld [vmem:[%s6 + $0x40] sm:$0xff]
    %v584 = vld [vmem:[%s6 + $0x48] sm:$0xff]
    %v585 = vld [vmem:[%s6 + $0x50] sm:$0xff]
    %v586 = vld [vmem:[%s6 + $0x58] sm:$0xff]
    %v587 = vld [vmem:[%s6 + $0x60] sm:$0xff]
    %v588 = vld [vmem:[%s6 + $0x68] sm:$0xff]
    %v589 = vld [vmem:[%s6 + $0x70] sm:$0xff]
    %v590 = vld [vmem:[%s6 + $0x78] sm:$0xff]
    %v591 = vld [vmem:[%s6 + $0x80] sm:$0xff]
    %v592 = vld [vmem:[%s6 + $0x88] sm:$0xff]
    %v593 = vld [vmem:[%s6 + $0x90] sm:$0xff]
    %v594 = vld [vmem:[%s6 + $0x98] sm:$0xff]
    %v595 = vld [vmem:[%s6 + $0xa0] sm:$0xff]
    %v596 = vld [vmem:[%s6 + $0xa8] sm:$0xff]
    %v597 = vld [vmem:[%s6 + $0xb0] sm:$0xff]
    %v598 = vld [vmem:[%s6 + $0xb8] sm:$0xff]
    %v599 = vld [vmem:[%s6 + $0xc0] sm:$0xff]
    %v600 = vld [vmem:[%s6 + $0xc8] sm:$0xff]
    %v601 = vld [vmem:[%s6 + $0xd0] sm:$0xff]
    %v602 = vld [vmem:[%s6 + $0xd8] sm:$0xff]
    %v603 = vld [vmem:[%s6 + $0xe0] sm:$0xff]
    %v604 = vld [vmem:[%s6 + $0xe8] sm:$0xff]
    %v605 = vld [vmem:[%s6 + $0xf0] sm:$0xff]
    %v606 = vld [vmem:[%s6 + $0xf8] sm:$0xff]
    %607 = vmatprep.subr.mxu0 0.0
    %608 = vmatpush1.msra.mxu0 %v590
    %609 = vmatprep.subr.mxu0 0.0
    %610 = vmatpush1.msra.mxu0 %v589
    %611 = vmatprep.subr.mxu0 0.0
    %612 = vmatpush1.msra.mxu0 %v588
    %613 = vmatprep.subr.mxu0 0.0
    %614 = vmatpush1.msra.mxu0 %v587
    %615 = vmatprep.subr.mxu0 0.0
    %616 = vmatpush1.msra.mxu0 %v586
    %617 = vmatprep.subr.mxu0 0.0
    %618 = vmatpush1.msra.mxu0 %v585
    %619 = vmatprep.subr.mxu0 0.0
    %620 = vmatpush1.msra.mxu0 %v584
    %621 = vmatprep.subr.mxu0 0.0
    %622 = vmatpush1.msra.mxu0 %v583
    %623 = vmatprep.subr.mxu0 0.0
    %624 = vmatpush1.msra.mxu0 %v582
    %625 = vmatprep.subr.mxu0 0.0
    %626 = vmatpush1.msra.mxu0 %v581
    %627 = vmatprep.subr.mxu0 0.0
    %628 = vmatpush1.msra.mxu0 %v580
    %629 = vmatprep.subr.mxu0 0.0
    %630 = vmatpush1.msra.mxu0 %v579
    %631 = vmatprep.subr.mxu0 0.0
    %632 = vmatpush1.msra.mxu0 %v578
    %633 = vmatprep.subr.mxu0 0.0
    %634 = vmatpush1.msra.mxu0 %v577
    %635 = vmatprep.subr.mxu0 0.0
    %636 = vmatpush1.msra.mxu0 %v576
    %637 = vmatprep.subr.mxu0 0.0
    %638 = vmatpush1.msra.mxu0 %v575
    %639 = vmatprep.subr.mxu0 0.0
    %640 = vmatpush2.msra.mxu0 %v606
    %641 = vmatprep.subr.mxu0 0.0
    %642 = vmatpush2.msra.mxu0 %v605
    %643 = vmatprep.subr.mxu0 0.0
    %644 = vmatpush2.msra.mxu0 %v604
    %645 = vmatprep.subr.mxu0 0.0
    %646 = vmatpush2.msra.mxu0 %v603
    %647 = vmatprep.subr.mxu0 0.0
    %648 = vmatpush2.msra.mxu0 %v602
    %649 = vmatprep.subr.mxu0 0.0
    %650 = vmatpush2.msra.mxu0 %v601
    %651 = vmatprep.subr.mxu0 0.0
    %652 = vmatpush2.msra.mxu0 %v600
    %653 = vmatprep.subr.mxu0 0.0
    %654 = vmatpush2.msra.mxu0 %v599
    %655 = vmatprep.subr.mxu0 0.0
    %656 = vmatpush2.msra.mxu0 %v598
    %657 = vmatprep.subr.mxu0 0.0
    %658 = vmatpush2.msra.mxu0 %v597
    %659 = vmatprep.subr.mxu0 0.0
    %660 = vmatpush2.msra.mxu0 %v596
    %661 = vmatprep.subr.mxu0 0.0
    %662 = vmatpush2.msra.mxu0 %v595
    %663 = vmatprep.subr.mxu0 0.0
    %664 = vmatpush2.msra.mxu0 %v594
    %665 = vmatprep.subr.mxu0 0.0
    %666 = vmatpush2.msra.mxu0 %v593
    %667 = vmatprep.subr.mxu0 0.0
    %668 = vmatpush2.msra.mxu0 %v592
    %669 = vmatprep.subr.mxu0 0.0
    %670 = vmatpush2.msra.mxu0 %v591
    %671 = vmatprep.mubr.f32.mxu0 %v574
    %672 = vmatmul.mubr.f32.gmra.mxu0 %v572
    %v673 = vpop.f32.mrf.mxu0
    %v674 = vadd.f32 0.0, %v673
    %v675 = vpop.f32.mrf.mxu0
    %676 = vdwg.mxu0
    %v677 = vld [vmem:[%s7] sm:$0xff]
    %v678 = vld [vmem:[%s7 + $0x8] sm:$0xff]
    %v679 = vld [vmem:[%s7 + $0x10] sm:$0xff]
    %v680 = vld [vmem:[%s7 + $0x18] sm:$0xff]
    %v681 = vld [vmem:[%s7 + $0x20] sm:$0xff]
    %v682 = vld [vmem:[%s7 + $0x28] sm:$0xff]
    %v683 = vld [vmem:[%s7 + $0x30] sm:$0xff]
    %v684 = vld [vmem:[%s7 + $0x38] sm:$0xff]
    %v685 = vld [vmem:[%s7 + $0x40] sm:$0xff]
    %v686 = vld [vmem:[%s7 + $0x48] sm:$0xff]
    %v687 = vld [vmem:[%s7 + $0x50] sm:$0xff]
    %v688 = vld [vmem:[%s7 + $0x58] sm:$0xff]
    %v689 = vld [vmem:[%s7 + $0x60] sm:$0xff]
    %v690 = vld [vmem:[%s7 + $0x68] sm:$0xff]
    %v691 = vld [vmem:[%s7 + $0x70] sm:$0xff]
    %v692 = vld [vmem:[%s7 + $0x78] sm:$0xff]
    %v693 = vld [vmem:[%s8] sm:$0x1]
    %v695 = vlaneseq
    %v696 = vshrl.u32 %v695, 7
    %v697 = vsub.s32 0, %v696
    %v698 = vrot.slane %v693, %v697
    %700 = vmatprep.subr.mxu0 0.0
    %701 = vmatpush1.msra.mxu0 %v692
    %702 = vmatprep.subr.mxu0 0.0
    %703 = vmatpush1.msra.mxu0 %v691
    %704 = vmatprep.subr.mxu0 0.0
    %705 = vmatpush1.msra.mxu0 %v690
    %706 = vmatprep.subr.mxu0 0.0
    %707 = vmatpush1.msra.mxu0 %v689
    %708 = vmatprep.subr.mxu0 0.0
    %709 = vmatpush1.msra.mxu0 %v688
    %710 = vmatprep.subr.mxu0 0.0
    %711 = vmatpush1.msra.mxu0 %v687
    %712 = vmatprep.subr.mxu0 0.0
    %713 = vmatpush1.msra.mxu0 %v686
    %714 = vmatprep.subr.mxu0 0.0
    %715 = vmatpush1.msra.mxu0 %v685
    %716 = vmatprep.subr.mxu0 0.0
    %717 = vmatpush1.msra.mxu0 %v684
    %718 = vmatprep.subr.mxu0 0.0
    %719 = vmatpush1.msra.mxu0 %v683
    %720 = vmatprep.subr.mxu0 0.0
    %721 = vmatpush1.msra.mxu0 %v682
    %722 = vmatprep.subr.mxu0 0.0
    %723 = vmatpush1.msra.mxu0 %v681
    %724 = vmatprep.subr.mxu0 0.0
    %725 = vmatpush1.msra.mxu0 %v680
    %726 = vmatprep.subr.mxu0 0.0
    %727 = vmatpush1.msra.mxu0 %v679
    %728 = vmatprep.subr.mxu0 0.0
    %729 = vmatpush1.msra.mxu0 %v678
    %730 = vmatprep.subr.mxu0 0.0
    %731 = vmatpush1.msra.mxu0 %v677
    %732 = vmatprep.subr.mxu0 0.0
    %733 = vmatpush2.msra.mxu0 0.0
    %734 = vmatprep.subr.mxu0 0.0
    %735 = vmatpush2.msra.mxu0 0.0
    %736 = vmatprep.subr.mxu0 0.0
    %737 = vmatpush2.msra.mxu0 0.0
    %738 = vmatprep.subr.mxu0 0.0
    %739 = vmatpush2.msra.mxu0 0.0
    %740 = vmatprep.subr.mxu0 0.0
    %741 = vmatpush2.msra.mxu0 0.0
    %742 = vmatprep.subr.mxu0 0.0
    %743 = vmatpush2.msra.mxu0 0.0
    %744 = vmatprep.subr.mxu0 0.0
    %745 = vmatpush2.msra.mxu0 0.0
    %746 = vmatprep.subr.mxu0 0.0
    %747 = vmatpush2.msra.mxu0 0.0
    %748 = vmatprep.subr.mxu0 0.0
    %749 = vmatpush2.msra.mxu0 0.0
    %750 = vmatprep.subr.mxu0 0.0
    %751 = vmatpush2.msra.mxu0 0.0
    %752 = vmatprep.subr.mxu0 0.0
    %753 = vmatpush2.msra.mxu0 0.0
    %754 = vmatprep.subr.mxu0 0.0
    %755 = vmatpush2.msra.mxu0 0.0
    %756 = vmatprep.subr.mxu0 0.0
    %757 = vmatpush2.msra.mxu0 0.0
    %758 = vmatprep.subr.mxu0 0.0
    %759 = vmatpush2.msra.mxu0 0.0
    %760 = vmatprep.subr.mxu0 0.0
    %761 = vmatpush2.msra.mxu0 0.0
    %762 = vmatprep.subr.mxu0 0.0
    %763 = vmatpush2.msra.mxu0 0.0
    %764 = vmatprep.mubr.f32.mxu0 0.0
    %765 = vmatmul.mubr.f32.gmra.mxu0 %v674
    %v766 = vpop.f32.mrf.mxu0
    %v767 = vadd.f32 %v698, %v766
    %v768 = vpop.f32.mrf.mxu0
    %769 = vdwg.mxu0
    %770 = vst [vmem:[%s9] sm:$0xff] %v674
    %771 = vst [vmem:[%s10] sm:$0xff] %v767
    // Predicated region
    $region42: #{generator_forward.1} parent=1 // pred_check
      _
    $region43: #{generator_forward.1} parent=1 // pred_check_branch
      %773 = sbr.rel (0) target = $region45
    $region44: #{generator_forward.1} parent=1 // pred_region
      _
    $region45: #{generator_forward.1} parent=1 // pred_fallthru
      _
    // Predicated region
    $region46: #{generator_forward.1} parent=1 // pred_check
      _
    $region47: #{generator_forward.1} parent=1 // pred_check_branch
      %775 = sbr.rel (0) target = $region49
    $region48: #{generator_forward.1} parent=1 // pred_region
      _
    $region49: #{generator_forward.1} parent=1 // pred_fallthru
      _
    // Predicated region
    $region50: #{generator_forward.1} parent=1 // pred_check
      _
    $region51: #{generator_forward.1} parent=1 // pred_check_branch
      %777 = sbr.rel (0) target = $region53
    $region52: #{generator_forward.1} parent=1 // pred_region
      _
    $region53: #{generator_forward.1} parent=1 // pred_fallthru
      _
    // Predicated region
    $region54: #{generator_forward.1} parent=1 // pred_check
      _
    $region55: #{generator_forward.1} parent=1 // pred_check_branch
      %779 = sbr.rel (0) target = $region57
    $region56: #{generator_forward.1} parent=1 // pred_region
      _
    $region57: #{generator_forward.1} parent=1 // pred_fallthru
      _
    %780 = vsyncpa [#allocation3], 1

</llo_original>
